<compile_context>
chip_gen: v5e
topology: v5e:2x2
jax: 0.10.0
libtpu: 0.0.40
codegen_flags: <defaults>
</compile_context>

<pallas_src>
import jax
import jax.numpy as jnp
from jax import lax
from jax.experimental import pallas as pl
from jax.experimental.pallas import tpu as pltpu


# ------------------------------ kernel side --------------------------------

def _rdb_conv_kernel(x_ref, top_ref, bot_ref, w_ref, b_ref, o_ref):
    """One (batch, H-tile) step of  cat([x, relu(conv3x3(x))], channel)."""
    x = x_ref[0]                                    # (TH, W, Cin)  f32
    TH, W, Cin = x.shape
    G = b_ref.shape[-1]

    # Halo'd input rows for this tile, bf16 for the MXU (f32 accumulation
    # below).  Local row j <-> original image row t*TH + j - 1.
    xin = jnp.concatenate(
        [top_ref[0], x.astype(jnp.bfloat16), bot_ref[0]], axis=0)   # (TH+2, W, Cin)

    # dx taps as lanes: pad W once, 3 static slices, one lane concat.
    xw = jnp.pad(xin, ((0, 0), (1, 1), (0, 0)))                     # (TH+2, W+2, Cin)
    row = jnp.concatenate([xw[:, dx:dx + W, :] for dx in range(3)],
                          axis=-1)                                   # (TH+2, W, 3*Cin)

    # dy taps as output column groups: a single MXU matmul with K = 3*Cin and
    # N = 3*G (192x192 at RDN widths) instead of K=9*Cin, N=G.
    y = jnp.dot(row.reshape((TH + 2) * W, 3 * Cin), w_ref[...],
                preferred_element_type=jnp.float32)                  # ((TH+2)*W, 3*G)
    y = y.reshape(TH + 2, W, 3 * G)

    # out[h] = sum_dy Y[h + dy, dy-th column group]  -> three cheap
    # leading-axis shifted adds, then bias + ReLU in f32.
    acc = (y[0:TH, :, 0 * G:1 * G]
           + y[1:TH + 1, :, 1 * G:2 * G]
           + y[2:TH + 2, :, 2 * G:3 * G]
           + b_ref[...])
    out = jnp.maximum(acc, 0.0)

    # torch.cat((x, out), dim=1): one lane-dense (Cin + G = 128) store.
    o_ref[0] = jnp.concatenate([x, out], axis=-1).astype(o_ref.dtype)


# --------------------------- VMEM-aware tile sizing -------------------------

def _vmem_capacity_bytes():
    """Physical VMEM per TensorCore (used only to size H tiles)."""
    try:
        info = pltpu.get_tpu_info()
        cap = getattr(info, "vmem_capacity_bytes", None)
        if cap:
            return int(cap)
    except Exception:
        pass
    return 64 << 20            # conservative (v7x-sized) fallback


def _step_vmem_bytes(tile_h, W, Cin, G):
    """Rough per-grid-step footprint: double-buffered blocks + transients."""
    th2 = tile_h + 2
    pix, pixh = tile_h * W, th2 * W
    by = 0
    by += 2 * pix * Cin * 4                  # x block (f32, double buffered)
    by += 2 * pix * (Cin + G) * 4            # out block (f32, double buffered)
    by += 2 * 2 * W * Cin * 2                # halo rows (bf16, double buffered)
    by += 3 * Cin * 3 * G * 2 + G * 4        # resident weights + bias
    by += pixh * Cin * 2                     # halo'd tile (bf16)
    by += pixh * 3 * Cin * 2                 # dx-expanded rows (bf16)
    by += pixh * 3 * G * 4                   # matmul result (f32)
    by += pix * (Cin + G) * 4                # concat staging (f32)
    return by


def _pick_tile_h(H, W, Cin, G):
    """Largest divisor of H whose per-step footprint fits the VMEM budget.

    Budget is 3/8 of physical VMEM (headroom for compiler scratch), so tile
    sizes re-derive per generation: v7x (64 MiB) gets ~half the rows of
    v5e/v6e (128 MiB).
    """
    budget = _vmem_capacity_bytes() * 3 // 8
    best = 1
    for th in range(1, H + 1):
        if H % th == 0 and _step_vmem_bytes(th, W, Cin, G) <= budget:
            best = th
    return best


# ------------------------------ host wrapper --------------------------------

def rdb_conv_forward(x_nchw, w_oihw, bias, *, tile_h=None, out_dtype=jnp.float32):
    """Pallas forward of RDB_Conv.

    x_nchw: (N, Cin, H, W);  w_oihw: (G, Cin, 3, 3) (PyTorch OIHW);  bias: (G,).
    Returns (N, Cin + G, H, W).
    """
    N, Cin, H, W = x_nchw.shape
    G, wc, kh, kw = w_oihw.shape
    assert (wc, kh, kw) == (Cin, 3, 3), "expected a 3x3 conv with matching Cin"
    Cout = Cin + G

    if tile_h is None:
        tile_h = _pick_tile_h(H, W, Cin, G)
    assert H % tile_h == 0, "H must be divisible by tile_h"
    n_tiles = H // tile_h

    # NHWC activations.  x stays f32 (exact torch.cat passthrough); it is cast
    # to bf16 inside the kernel for the MXU.  The H-padded copy only feeds the
    # 1-row halos, so it is bf16 already (rows 0 and H+1 are the zero padding).
    x = jnp.transpose(x_nchw, (0, 2, 3, 1)).astype(jnp.float32)          # (N,H,W,Cin)
    x_halo = jnp.pad(x, ((0, 0), (1, 1), (0, 0), (0, 0))).astype(jnp.bfloat16)

    # Weights reshaped so dy indexes OUTPUT column groups:
    #   w_mat[dx*Cin + c, dy*G + g] = w_oihw[g, c, dy, dx]
    w_mat = (jnp.transpose(w_oihw, (3, 1, 2, 0))        # (dx, Cin, dy, G)
             .reshape(3 * Cin, 3 * G).astype(jnp.bfloat16))
    b = bias.reshape(1, G).astype(jnp.float32)

    vmem_limit = int(min(max(2 * _step_vmem_bytes(tile_h, W, Cin, G), 32 << 20),
                         48 << 20))

    out = pl.pallas_call(
        _rdb_conv_kernel,
        out_shape=jax.ShapeDtypeStruct((N, H, W, Cout), out_dtype),
        grid=(N, n_tiles),
        in_specs=[
            # main tile: rows [t*TH, (t+1)*TH) of the image for batch n.
            pl.BlockSpec((1, tile_h, W, Cin), lambda n, t: (n, t, 0, 0)),
            # 1-row halos from the H-padded copy: padded rows t*TH and
            # (t+1)*TH + 1 == original rows t*TH - 1 and (t+1)*TH (zeros at
            # the image border).  Block size 1 along H -> block index == row.
            pl.BlockSpec((1, 1, W, Cin), lambda n, t: (n, t * tile_h, 0, 0)),
            pl.BlockSpec((1, 1, W, Cin),
                         lambda n, t: (n, (t + 1) * tile_h + 1, 0, 0)),
            # weights / bias: constant index_map -> DMA'd once, stay resident.
            pl.BlockSpec((3 * Cin, 3 * G), lambda n, t: (0, 0)),
            pl.BlockSpec((1, G), lambda n, t: (0, 0)),
        ],
        out_specs=pl.BlockSpec((1, tile_h, W, Cout), lambda n, t: (n, t, 0, 0)),
        compiler_params=pltpu.CompilerParams(
            # every (batch, H-tile) step is independent -> both axes parallel,
            # giving the v7x megacore a grid extent > 2 to split.
            dimension_semantics=("parallel", "parallel"),
            vmem_limit_bytes=vmem_limit,
        ),
    )(x, x_halo, x_halo, w_mat, b)

    return jnp.transpose(out, (0, 3, 1, 2))       # back to NCHW


# --------------------------- pure-JAX reference -----------------------------

def rdb_conv_reference(x_nchw, w_oihw, bias):
    x = jnp.transpose(x_nchw, (0, 2, 3, 1)).astype(jnp.float32)
    w_hwio = jnp.transpose(w_oihw, (2, 3, 1, 0)).astype(jnp.float32)
    out = lax.conv_general_dilated(
        x, w_hwio, window_strides=(1, 1), padding="SAME",
        dimension_numbers=("NHWC", "HWIO", "NHWC"))
    out = jnp.maximum(out + bias.reshape(1, 1, 1, -1), 0.0)
    full = jnp.concatenate([x, out], axis=-1)
    return jnp.transpose(full, (0, 3, 1, 2))


# ----------------------------------- main ------------------------------------

if __name__ == "__main__":
    # RDN defaults: inChannels = G0 = 64, growRate = G = 64 -> Cout = 128, so
    # the concatenated output stores are full-lane (128) dense.
    N, Cin, G, H, W = 2, 64, 64, 16, 16

    key = jax.random.PRNGKey(0)
    kx, kw, kb = jax.random.split(key, 3)
    x = jax.random.normal(kx, (N, Cin, H, W), jnp.float32)             # NCHW
    w = 0.1 * jax.random.normal(kw, (G, Cin, 3, 3), jnp.float32)       # OIHW
    b = 0.1 * jax.random.normal(kb, (G,), jnp.float32)

    y_ref = jax.block_until_ready(rdb_conv_reference(x, w, b))

    # tile_h=4 exercises interior H-tiles (real data in both halos);
    # tile_h=16 is the single-tile path.  Production sizes: tile_h=None
    # auto-picks the largest tile fitting the per-generation VMEM budget.
    for tile_h in (4, 16):
        y = jax.block_until_ready(rdb_conv_forward(x, w, b, tile_h=tile_h))
        assert y.shape == (N, Cin + G, H, W)
        # bf16 MXU operands with f32 accumulation -> ~1e-2-level tolerance;
        # the concatenated x half is exact f32.
        assert jnp.allclose(y, y_ref, atol=3e-2, rtol=3e-2), \
            f"mismatch vs reference (tile_h={tile_h})"

    print("KERNEL_OK")
</pallas_src>

<mosaic_0001>
module attributes {stable_mosaic.version = 11 : i64} {
  func.func @_rdb_conv_kernel(%arg0: i32, %arg1: i32, %arg2: memref<1x4x16x64xf32, #tpu.memory_space<vmem>>, %arg3: memref<1x1x16x64xbf16, #tpu.memory_space<vmem>>, %arg4: memref<1x1x16x64xbf16, #tpu.memory_space<vmem>>, %arg5: memref<192x192xbf16, #tpu.memory_space<vmem>>, %arg6: memref<1x64xf32, #tpu.memory_space<vmem>>, %arg7: memref<1x4x16x128xf32, #tpu.memory_space<vmem>>) attributes {dimension_semantics = [#tpu.dimension_semantics<parallel>, #tpu.dimension_semantics<parallel>], iteration_bounds = array<i64: 2, 4>, scalar_prefetch = 0 : i64, scratch_operands = 0 : i64, tpu.core_type = #tpu.core_type<tc>, window_params = [{transform_indices = @transform_0, window_bounds = array<i64: 1, 4, 16, 64>}, {transform_indices = @transform_1, window_bounds = array<i64: 1, 1, 16, 64>}, {transform_indices = @transform_2, window_bounds = array<i64: 1, 1, 16, 64>}, {pipeline_mode = #tpu.pipeline_mode<synchronous>, transform_indices = @transform_3, window_bounds = array<i64: 192, 192>}, {pipeline_mode = #tpu.pipeline_mode<synchronous>, transform_indices = @transform_4, window_bounds = array<i64: 1, 64>}, {transform_indices = @transform_5, window_bounds = array<i64: 1, 4, 16, 128>}]} {
    %c0 = arith.constant 0 : index
    %c0_0 = arith.constant 0 : index
    %c0_1 = arith.constant 0 : index
    %c0_2 = arith.constant 0 : index
    %0 = vector.load %arg2[%c0, %c0_0, %c0_1, %c0_2] : memref<1x4x16x64xf32, #tpu.memory_space<vmem>>, vector<1x4x16x64xf32>
    %1 = vector.shape_cast %0 : vector<1x4x16x64xf32> to vector<4x16x64xf32>
    %c0_3 = arith.constant 0 : index
    %c0_4 = arith.constant 0 : index
    %c0_5 = arith.constant 0 : index
    %c0_6 = arith.constant 0 : index
    %2 = vector.load %arg3[%c0_3, %c0_4, %c0_5, %c0_6] : memref<1x1x16x64xbf16, #tpu.memory_space<vmem>>, vector<1x1x16x64xbf16>
    %3 = vector.shape_cast %2 : vector<1x1x16x64xbf16> to vector<1x16x64xbf16>
    %4 = arith.truncf %1 : vector<4x16x64xf32> to vector<4x16x64xbf16>
    %c0_7 = arith.constant 0 : index
    %c0_8 = arith.constant 0 : index
    %c0_9 = arith.constant 0 : index
    %c0_10 = arith.constant 0 : index
    %5 = vector.load %arg4[%c0_7, %c0_8, %c0_9, %c0_10] : memref<1x1x16x64xbf16, #tpu.memory_space<vmem>>, vector<1x1x16x64xbf16>
    %6 = vector.shape_cast %5 : vector<1x1x16x64xbf16> to vector<1x16x64xbf16>
    %7 = tpu.concatenate %3, %4, %6 in 0 : vector<1x16x64xbf16>, vector<4x16x64xbf16>, vector<1x16x64xbf16> -> vector<6x16x64xbf16>
    %c0_i32 = arith.constant 0 : i32
    %8 = arith.sitofp %c0_i32 : i32 to bf16
    %9 = vector.broadcast %8 : bf16 to vector<6x1x64xbf16>
    %10 = tpu.concatenate %9, %7 in 1 : vector<6x1x64xbf16>, vector<6x16x64xbf16> -> vector<6x17x64xbf16>
    %11 = vector.broadcast %8 : bf16 to vector<6x1x64xbf16>
    %12 = tpu.concatenate %10, %11 in 1 : vector<6x17x64xbf16>, vector<6x1x64xbf16> -> vector<6x18x64xbf16>
    %13 = vector.extract_strided_slice %12 {offsets = [0, 0, 0], sizes = [6, 16, 64], strides = [1, 1, 1]} : vector<6x18x64xbf16> to vector<6x16x64xbf16>
    %14 = vector.extract_strided_slice %12 {offsets = [0, 1, 0], sizes = [6, 16, 64], strides = [1, 1, 1]} : vector<6x18x64xbf16> to vector<6x16x64xbf16>
    %15 = vector.extract_strided_slice %12 {offsets = [0, 2, 0], sizes = [6, 16, 64], strides = [1, 1, 1]} : vector<6x18x64xbf16> to vector<6x16x64xbf16>
    %16 = tpu.concatenate %13, %14, %15 in 2 : vector<6x16x64xbf16>, vector<6x16x64xbf16>, vector<6x16x64xbf16> -> vector<6x16x192xbf16>
    %17 = vector.shape_cast %16 : vector<6x16x192xbf16> to vector<96x192xbf16>
    %c0_11 = arith.constant 0 : index
    %c0_12 = arith.constant 0 : index
    %18 = vector.load %arg5[%c0_11, %c0_12] : memref<192x192xbf16, #tpu.memory_space<vmem>>, vector<192x192xbf16>
    %cst = arith.constant dense<0.000000e+00> : vector<96x192xf32>
    %19 = tpu.matmul %17, %18, %cst {dimension_numbers = #tpu.dot_dimension_numbers<[1], [0], [0], [1], [0, 0, 1, 1], [], []>} : vector<96x192xbf16>, vector<192x192xbf16>, vector<96x192xf32> -> vector<96x192xf32>
    %20 = vector.shape_cast %19 : vector<96x192xf32> to vector<6x16x192xf32>
    %21 = vector.extract_strided_slice %20 {offsets = [0, 0, 0], sizes = [4, 16, 64], strides = [1, 1, 1]} : vector<6x16x192xf32> to vector<4x16x64xf32>
    %22 = vector.extract_strided_slice %20 {offsets = [1, 0, 64], sizes = [4, 16, 64], strides = [1, 1, 1]} : vector<6x16x192xf32> to vector<4x16x64xf32>
    %23 = arith.addf %21, %22 : vector<4x16x64xf32>
    %24 = vector.extract_strided_slice %20 {offsets = [2, 0, 128], sizes = [4, 16, 64], strides = [1, 1, 1]} : vector<6x16x192xf32> to vector<4x16x64xf32>
    %25 = arith.addf %23, %24 : vector<4x16x64xf32>
    %c0_13 = arith.constant 0 : index
    %c0_14 = arith.constant 0 : index
    %26 = vector.load %arg6[%c0_13, %c0_14] : memref<1x64xf32, #tpu.memory_space<vmem>>, vector<1x64xf32>
    %27 = vector.shape_cast %26 : vector<1x64xf32> to vector<1x1x64xf32>
    %28 = vector.broadcast %27 : vector<1x1x64xf32> to vector<4x16x64xf32>
    %29 = arith.addf %25, %28 : vector<4x16x64xf32>
    %cst_15 = arith.constant 0.000000e+00 : f32
    %30 = vector.broadcast %cst_15 : f32 to vector<4x16x64xf32>
    %31 = arith.maximumf %29, %30 : vector<4x16x64xf32>
    %32 = tpu.concatenate %1, %31 in 2 : vector<4x16x64xf32>, vector<4x16x64xf32> -> vector<4x16x128xf32>
    %c0_16 = arith.constant 0 : index
    %c0_17 = arith.constant 0 : index
    %c0_18 = arith.constant 0 : index
    %c0_19 = arith.constant 0 : index
    %33 = vector.load %arg7[%c0_16, %c0_17, %c0_18, %c0_19] : memref<1x4x16x128xf32, #tpu.memory_space<vmem>>, vector<1x4x16x128xf32>
    %34 = vector.shape_cast %33 : vector<1x4x16x128xf32> to vector<4x16x128xf32>
    %35 = vector.shape_cast %32 : vector<4x16x128xf32> to vector<1x4x16x128xf32>
    tpu.vector_store %arg7[%c0_16, %c0_17, %c0_18, %c0_19], %35 {strides = array<i32>} : memref<1x4x16x128xf32, #tpu.memory_space<vmem>>, vector<1x4x16x128xf32>,
    return
  }
  func.func @transform_0(%arg0: i32, %arg1: i32) -> (i32, i32, i32, i32) {
    %c0_i32 = arith.constant 0 : i32
    %c0_i32_0 = arith.constant 0 : i32
    %c0_i32_1 = arith.constant 0 : i32
    return %arg0, %arg1, %c0_i32, %c0_i32_0 : i32, i32, i32, i32
  }
  func.func @transform_1(%arg0: i32, %arg1: i32) -> (i32, i32, i32, i32) {
    %c4_i32 = arith.constant 4 : i32
    %0 = arith.muli %arg1, %c4_i32 : i32
    %c0_i32 = arith.constant 0 : i32
    %c0_i32_0 = arith.constant 0 : i32
    %c0_i32_1 = arith.constant 0 : i32
    return %arg0, %0, %c0_i32, %c0_i32_0 : i32, i32, i32, i32
  }
  func.func @transform_2(%arg0: i32, %arg1: i32) -> (i32, i32, i32, i32) {
    %c1_i32 = arith.constant 1 : i32
    %0 = arith.addi %arg1, %c1_i32 : i32
    %c4_i32 = arith.constant 4 : i32
    %1 = arith.muli %0, %c4_i32 : i32
    %c1_i32_0 = arith.constant 1 : i32
    %2 = arith.addi %1, %c1_i32_0 : i32
    %c0_i32 = arith.constant 0 : i32
    %c0_i32_1 = arith.constant 0 : i32
    %c0_i32_2 = arith.constant 0 : i32
    return %arg0, %2, %c0_i32, %c0_i32_1 : i32, i32, i32, i32
  }
  func.func @transform_3(%arg0: i32, %arg1: i32) -> (i32, i32) {
    %c0_i32 = arith.constant 0 : i32
    %c0_i32_0 = arith.constant 0 : i32
    %c0_i32_1 = arith.constant 0 : i32
    return %c0_i32, %c0_i32_0 : i32, i32
  }
  func.func @transform_4(%arg0: i32, %arg1: i32) -> (i32, i32) {
    %c0_i32 = arith.constant 0 : i32
    %c0_i32_0 = arith.constant 0 : i32
    %c0_i32_1 = arith.constant 0 : i32
    return %c0_i32, %c0_i32_0 : i32, i32
  }
  func.func @transform_5(%arg0: i32, %arg1: i32) -> (i32, i32, i32, i32) {
    %c0_i32 = arith.constant 0 : i32
    %c0_i32_0 = arith.constant 0 : i32
    %c0_i32_1 = arith.constant 0 : i32
    return %arg0, %arg1, %c0_i32, %c0_i32_0 : i32, i32, i32, i32
  }
}

</mosaic_0001>

<llo_original>
// kernel: tpu_custom_call.1
$region0: #{tpu_custom_call.1}
  #allocation0 [shape = 'u32[]', space=smem, size = 0x4, offset = 0x4, fixed_abs, tag = 'smem constant byte address 0x4 - core index']
  #allocation1 [shape = 'u32[72,128]{1,0:T(1,128)}', space=vmem, size = 0x9000, scoped, tag = 'internal scratch']
  %s0 = inlined_call_operand.hbm [shape: f32[2,16,16,64], index: 0, kind: input, shape index: {}]
  %s1 = inlined_call_operand.hbm [shape: bf16[2,18,16,64], index: 1, kind: input, shape index: {}]
  %s2 = inlined_call_operand.hbm [shape: bf16[2,18,16,64], index: 2, kind: input, shape index: {}]
  %s3 = inlined_call_operand.hbm [shape: bf16[192,192], index: 3, kind: input, shape index: {}]
  %s4 = inlined_call_operand.vmem [shape: f32[1,64], index: 4, kind: input, shape index: {}]
  %s5 = inlined_call_operand.hbm [shape: f32[2,16,16,128], index: 5, kind: output, shape index: {}]
  %s6 = sld [smem:[#allocation0]]
  $region69: #{tpu_custom_call.1} parent=0
    _
  %s8 = ssub.s32 1, %s6
  %s9 = scalar_select 0, %s8, %s6
  $region1: #{tpu_custom_call.1} parent=0
    #allocation2 [shape = 'u8[65536]{0}', space=vmem, size = 0x10000, scoped, tag = 'input window, operand 0']
    #allocation3 [shape = 's32[2]{0}', space=sflag, size = 0x8, scoped, tag = 'scoped memory for tpu_custom_call.1']
    #allocation4 [shape = 's32[2]{0}', space=sflag, size = 0x8, scoped, tag = 'scoped memory for tpu_custom_call.1']
    #allocation5 [shape = 'u8[8192]{0}', space=vmem, size = 0x2000, scoped, tag = 'input window, operand 1']
    #allocation6 [shape = 's32[2]{0}', space=sflag, size = 0x8, scoped, tag = 'scoped memory for tpu_custom_call.1']
    #allocation7 [shape = 'u8[8192]{0}', space=vmem, size = 0x2000, scoped, tag = 'input window, operand 2']
    #allocation8 [shape = 'u8[98304]{0}', space=vmem, size = 0x18000, scoped, tag = 'input window, operand 3, single buffered']
    #allocation9 [shape = 's32[1]{0}', space=sflag, size = 0x4, scoped, tag = 'scoped memory for tpu_custom_call.1']
    #allocation10 [shape = 'u8[65536]{0}', space=vmem, size = 0x10000, scoped, tag = 'output window, operand 0']
    %10 = vsyncpa [#allocation3], 0
    %s11 = scalar_lea.sflag [#allocation3], 1
    %12 = vsyncpa %s11, 0
    %13 = vsyncpa [#allocation6], 0
    %s14 = scalar_lea.sflag [#allocation6], 1
    %15 = vsyncpa %s14, 0
    %16 = vsyncpa [#allocation9], 0
    %17 = vsyncpa [#allocation4], 0
    %s18 = scalar_lea.sflag [#allocation4], 1
    %19 = vsyncpa %s18, 0
    loop: start=0, step=1, limit=10
    $region2: #{tpu_custom_call.1} parent=1 // loop_pre_header
      _
    $region3: #{tpu_custom_call.1} parent=1 // loop_header
      %s21 = sphi 0, %s25
      %p22 = scmp.ge.s32.totalorder %s21, 10
      %s28 = sphi 0, %s40
      %s29 = sphi 0, %s36
      %s30 = sphi 0, %s28
      %s31 = sphi 0, %s29
      %s32 = sphi 0, %s30
      %s33 = sphi 0, %s31
      %s45 = sphi 0, %s47
      %s48 = sphi 0, %s45
      %s49 = sphi 0, %s48
      %s65 = sphi 0, %s49
      %s75 = sphi 0, %s77
      %s78 = sphi 0, %s75
      %s79 = sphi 0, %s78
      %s95 = sphi 0, %s79
      %s109 = sphi 0, %s111
      %s112 = sphi 0, %s109
      %s113 = sphi 0, %s112
      %s129 = sphi 0, %s113
      %s133 = sphi 0, %s133
      %s135 = sphi 0, %s133
      %s136 = sphi 0, %s135
      %s150 = sphi 0, %s136
      %s154 = sphi 0, %s154
      %s156 = sphi 0, %s154
      %s157 = sphi 0, %s156
      %s171 = sphi 0, %s157
      %s179 = sphi 0, %s181
      %s182 = sphi 0, %s179
      %s183 = sphi 0, %s182
      %s199 = sphi 0, %s183
    $region4: #{tpu_custom_call.1} parent=1 // loop_header_branch
      %24 = sbr.rel (%p22) target = $region8
    $region5: #{tpu_custom_call.1} parent=1 // loop_body
      %s26 = ssub.s32 %s21, 1
      %s27 = ssub.s32 %s21, 2
      %s34 = sadd.s32 1, %s29
      %p35 = scmp.ge.s32.totalorder %s34, 4
      %s36 = scalar_select %p35, 0, %s34
      %s37 = sadd.s32 1, %s28
      %s38 = scalar_select %p35, %s37, %s28
      %p39 = scmp.ge.s32.totalorder %s38, 2
      %s40 = scalar_select %p39, 0, %s38
      %s41 = ssub.s32 %s28, %s40
      %s42 = ssub.s32 %s29, %s36
      %s43 = sor.u32 %s41, %s42
      %p44 = scmp.eq.s32.totalorder %s43, 0
      %s46 = sadd.s32 %s45, 1
      %s47 = scalar_select %p44, %s45, %s46
      %p50 = pneg %p44
      %p51 = scmp.eq.s32.totalorder %s21, 7
      %p52 = por %p50, %p51
      %p53 = scmp.ne.s32.totalorder %s45, %s48
      %p54 = scmp.eq.s32.totalorder %s21, 0
      %p55 = por %p53, %p54
      %p56 = scmp.ne.s32.totalorder %s45, %s48
      %p57 = scmp.eq.s32.totalorder %s26, 7
      %p58 = por %p56, %p57
      %p59 = scmp.ne.s32.totalorder %s48, %s49
      %p60 = scmp.eq.s32.totalorder %s26, 0
      %p61 = por %p59, %p60
      %p62 = scmp.ne.s32.totalorder %s48, %s49
      %p63 = scmp.eq.s32.totalorder %s27, 7
      %p64 = por %p62, %p63
      %p66 = scmp.ne.s32.totalorder %s49, %s65
      %p67 = scmp.eq.s32.totalorder %s27, 0
      %p68 = por %p66, %p67
      %s69 = smul.u32 %s29, 4
      %s70 = smul.u32 %s36, 4
      %s71 = ssub.s32 %s28, %s40
      %s72 = ssub.s32 %s69, %s70
      %s73 = sor.u32 %s71, %s72
      %p74 = scmp.eq.s32.totalorder %s73, 0
      %s76 = sadd.s32 %s75, 1
      %s77 = scalar_select %p74, %s75, %s76
      %p80 = pneg %p74
      %p81 = scmp.eq.s32.totalorder %s21, 7
      %p82 = por %p80, %p81
      %p83 = scmp.ne.s32.totalorder %s75, %s78
      %p84 = scmp.eq.s32.totalorder %s21, 0
      %p85 = por %p83, %p84
      %p86 = scmp.ne.s32.totalorder %s75, %s78
      %p87 = scmp.eq.s32.totalorder %s26, 7
      %p88 = por %p86, %p87
      %p89 = scmp.ne.s32.totalorder %s78, %s79
      %p90 = scmp.eq.s32.totalorder %s26, 0
      %p91 = por %p89, %p90
      %p92 = scmp.ne.s32.totalorder %s78, %s79
      %p93 = scmp.eq.s32.totalorder %s27, 7
      %p94 = por %p92, %p93
      %p96 = scmp.ne.s32.totalorder %s79, %s95
      %p97 = scmp.eq.s32.totalorder %s27, 0
      %p98 = por %p96, %p97
      %s99 = sadd.s32 %s29, 1
      %s100 = smul.u32 %s99, 4
      %s101 = sadd.s32 %s100, 1
      %s102 = sadd.s32 %s36, 1
      %s103 = smul.u32 %s102, 4
      %s104 = sadd.s32 %s103, 1
      %s105 = ssub.s32 %s28, %s40
      %s106 = ssub.s32 %s101, %s104
      %s107 = sor.u32 %s105, %s106
      %p108 = scmp.eq.s32.totalorder %s107, 0
      %s110 = sadd.s32 %s109, 1
      %s111 = scalar_select %p108, %s109, %s110
      %p114 = pneg %p108
      %p115 = scmp.eq.s32.totalorder %s21, 7
      %p116 = por %p114, %p115
      %p117 = scmp.ne.s32.totalorder %s109, %s112
      %p118 = scmp.eq.s32.totalorder %s21, 0
      %p119 = por %p117, %p118
      %p120 = scmp.ne.s32.totalorder %s109, %s112
      %p121 = scmp.eq.s32.totalorder %s26, 7
      %p122 = por %p120, %p121
      %p123 = scmp.ne.s32.totalorder %s112, %s113
      %p124 = scmp.eq.s32.totalorder %s26, 0
      %p125 = por %p123, %p124
      %p126 = scmp.ne.s32.totalorder %s112, %s113
      %p127 = scmp.eq.s32.totalorder %s27, 7
      %p128 = por %p126, %p127
      %p130 = scmp.ne.s32.totalorder %s113, %s129
      %p131 = scmp.eq.s32.totalorder %s27, 0
      %p132 = por %p130, %p131
      %s134 = sadd.s32 %s133, 1
      %p137 = scmp.eq.s32.totalorder %s21, 7
      %p138 = scmp.ne.s32.totalorder %s133, %s135
      %p139 = scmp.eq.s32.totalorder %s21, 0
      %p140 = por %p138, %p139
      %p141 = scmp.ne.s32.totalorder %s133, %s135
      %p142 = scmp.eq.s32.totalorder %s26, 7
      %p143 = por %p141, %p142
      %p144 = scmp.ne.s32.totalorder %s135, %s136
      %p145 = scmp.eq.s32.totalorder %s26, 0
      %p146 = por %p144, %p145
      %p147 = scmp.ne.s32.totalorder %s135, %s136
      %p148 = scmp.eq.s32.totalorder %s27, 7
      %p149 = por %p147, %p148
      %p151 = scmp.ne.s32.totalorder %s136, %s150
      %p152 = scmp.eq.s32.totalorder %s27, 0
      %p153 = por %p151, %p152
      %s155 = sadd.s32 %s154, 1
      %p158 = scmp.eq.s32.totalorder %s21, 7
      %p159 = scmp.ne.s32.totalorder %s154, %s156
      %p160 = scmp.eq.s32.totalorder %s21, 0
      %p161 = por %p159, %p160
      %p162 = scmp.ne.s32.totalorder %s154, %s156
      %p163 = scmp.eq.s32.totalorder %s26, 7
      %p164 = por %p162, %p163
      %p165 = scmp.ne.s32.totalorder %s156, %s157
      %p166 = scmp.eq.s32.totalorder %s26, 0
      %p167 = por %p165, %p166
      %p168 = scmp.ne.s32.totalorder %s156, %s157
      %p169 = scmp.eq.s32.totalorder %s27, 7
      %p170 = por %p168, %p169
      %p172 = scmp.ne.s32.totalorder %s157, %s171
      %p173 = scmp.eq.s32.totalorder %s27, 0
      %p174 = por %p172, %p173
      %s175 = ssub.s32 %s28, %s40
      %s176 = ssub.s32 %s29, %s36
      %s177 = sor.u32 %s175, %s176
      %p178 = scmp.eq.s32.totalorder %s177, 0
      %s180 = sadd.s32 %s179, 1
      %s181 = scalar_select %p178, %s179, %s180
      %p184 = pneg %p178
      %p185 = scmp.eq.s32.totalorder %s21, 7
      %p186 = por %p184, %p185
      %p187 = scmp.ne.s32.totalorder %s179, %s182
      %p188 = scmp.eq.s32.totalorder %s21, 0
      %p189 = por %p187, %p188
      %p190 = scmp.ne.s32.totalorder %s179, %s182
      %p191 = scmp.eq.s32.totalorder %s26, 7
      %p192 = por %p190, %p191
      %p193 = scmp.ne.s32.totalorder %s182, %s183
      %p194 = scmp.eq.s32.totalorder %s26, 0
      %p195 = por %p193, %p194
      %p196 = scmp.ne.s32.totalorder %s182, %s183
      %p197 = scmp.eq.s32.totalorder %s27, 7
      %p198 = por %p196, %p197
      %p200 = scmp.ne.s32.totalorder %s183, %s199
      %p201 = scmp.eq.s32.totalorder %s27, 0
      %p202 = por %p200, %p201
      %p203 = scmp.le.s32.totalorder 1, %s21
      %p204 = scmp.lt.s32.totalorder %s21, 9
      %p205 = pnand %p203, %p204
      %p206 = pneg %p205
      // Predicated region
      $region9: #{tpu_custom_call.1} parent=5 // pred_check
        _
      $region10: #{tpu_custom_call.1} parent=5 // pred_check_branch
        %208 = sbr.rel (%p205) target = $region12
      $region11: #{tpu_custom_call.1} parent=5 // pred_region
        %s209 = ssub.s32 %s21, 1
        // Predicated region
        $region13: #{tpu_custom_call.1} parent=11 // pred_check
          %p210 = pneg %p146
        $region14: #{tpu_custom_call.1} parent=11 // pred_check_branch
          %212 = sbr.rel (%p210) target = $region16
        $region15: #{tpu_custom_call.1} parent=11 // pred_region
          %214 = vsyncadd [#allocation9], 0
          %s215 = sshll.u32 %s3, 4
          %s216 = int_to_ptr.hbm [resolvable:$true] %s215
          %s217 = sshll.u32 [#allocation8], 4
          %s218 = int_to_ptr.vmem [resolvable:$true] %s217
          %223 = dma.hbm_to_vmem [thread:$0]  %s216, 3072, %s218, [#allocation9], 128, 128, 8
        $region16: #{tpu_custom_call.1} parent=11 // pred_fallthru
          _
        // Predicated region
        $region17: #{tpu_custom_call.1} parent=11 // pred_check
          %p224 = pneg %p167
        $region18: #{tpu_custom_call.1} parent=11 // pred_check_branch
          %226 = sbr.rel (%p224) target = $region20
        $region19: #{tpu_custom_call.1} parent=11 // pred_region
          _
        $region20: #{tpu_custom_call.1} parent=11 // pred_fallthru
          _
      $region12: #{tpu_custom_call.1} parent=5 // pred_fallthru
        _
      %p227 = scmp.lt.s32.totalorder %s21, 8
      // Predicated region
      $region21: #{tpu_custom_call.1} parent=5 // pred_check
        %p228 = pneg %p227
      $region22: #{tpu_custom_call.1} parent=5 // pred_check_branch
        %230 = sbr.rel (%p228) target = $region24
      $region23: #{tpu_custom_call.1} parent=5 // pred_region
        // Predicated region
        $region25: #{tpu_custom_call.1} parent=23 // pred_check
          %p231 = pneg %p55
        $region26: #{tpu_custom_call.1} parent=23 // pred_check_branch
          %233 = sbr.rel (%p231) target = $region28
        $region27: #{tpu_custom_call.1} parent=23 // pred_region
          %s234 = sand.u32 %s45, 1
          %s235 = scalar_lea.sflag [#allocation3], %s234
          %s236 = sand.u32 %s45, 1
          %s237 = smul.addr %s236, 64
          %s238 = scalar_lea.vmem [#allocation2], %s237
          %s239 = smul.u32 4, %s29
          %241 = vsyncadd %s235, 0
          %s242 = smul.addr %s239, 2
          %s243 = smul.addr %s28, 32
          %s244 = sadd.s32 %s242, %s243
          %s245 = smul.addr %s244, 8
          %s246 = scalar_lea.hbm %s0, %s245
          %s247 = sshll.u32 %s246, 4
          %s248 = int_to_ptr.hbm [resolvable:$true] %s247
          %s249 = sshll.u32 %s238, 4
          %s250 = int_to_ptr.vmem [resolvable:$true] %s249
          %255 = dma.hbm_to_vmem [thread:$0]  %s248, 1024, %s250, %s235, 128, 128, 8
        $region28: #{tpu_custom_call.1} parent=23 // pred_fallthru
          _
        // Predicated region
        $region29: #{tpu_custom_call.1} parent=23 // pred_check
          %p256 = pneg %p85
        $region30: #{tpu_custom_call.1} parent=23 // pred_check_branch
          %258 = sbr.rel (%p256) target = $region32
        $region31: #{tpu_custom_call.1} parent=23 // pred_region
          %s259 = sand.u32 %s21, 1
          %s260 = scalar_lea.sflag [#allocation6], %s259
          %s261 = sand.u32 %s75, 1
          %s262 = smul.addr %s261, 8
          %s263 = scalar_lea.vmem [#allocation5], %s262
          %s264 = smul.u32 %s29, 4
          %266 = vsyncadd %s260, 0
          %s267 = smul.addr %s264, 2
          %s268 = smul.addr %s28, 36
          %s269 = sadd.s32 %s267, %s268
          %s270 = smul.addr %s269, 4
          %s271 = scalar_lea.hbm %s1, %s270
          %s272 = sshll.u32 %s271, 4
          %s273 = int_to_ptr.hbm [resolvable:$true] %s272
          %s274 = sshll.u32 %s263, 4
          %s275 = int_to_ptr.vmem [resolvable:$true] %s274
          %280 = dma.hbm_to_vmem [thread:$0]  %s273, 128, %s275, %s260, 64, 64, 4
        $region32: #{tpu_custom_call.1} parent=23 // pred_fallthru
          _
        // Predicated region
        $region33: #{tpu_custom_call.1} parent=23 // pred_check
          %p281 = pneg %p119
        $region34: #{tpu_custom_call.1} parent=23 // pred_check_branch
          %283 = sbr.rel (%p281) target = $region36
        $region35: #{tpu_custom_call.1} parent=23 // pred_region
          %s284 = sand.u32 %s21, 1
          %s285 = scalar_lea.sflag [#allocation6], %s284
          %s286 = sand.u32 %s109, 1
          %s287 = smul.addr %s286, 8
          %s288 = scalar_lea.vmem [#allocation7], %s287
          %s289 = sadd.s32 %s29, 1
          %s290 = smul.u32 %s289, 4
          %s291 = sadd.s32 %s290, 1
          %293 = vsyncadd %s285, 0
          %s294 = smul.addr %s291, 2
          %s295 = smul.addr %s28, 36
          %s296 = sadd.s32 %s294, %s295
          %s297 = smul.addr %s296, 4
          %s298 = scalar_lea.hbm %s2, %s297
          %s299 = sshll.u32 %s298, 4
          %s300 = int_to_ptr.hbm [resolvable:$true] %s299
          %s301 = sshll.u32 %s288, 4
          %s302 = int_to_ptr.vmem [resolvable:$true] %s301
          %307 = dma.hbm_to_vmem [thread:$0]  %s300, 128, %s302, %s285, 64, 64, 4
        $region36: #{tpu_custom_call.1} parent=23 // pred_fallthru
          _
      $region24: #{tpu_custom_call.1} parent=5 // pred_fallthru
        _
      %p308 = scmp.le.s32.totalorder 1, %s21
      %p309 = scmp.lt.s32.totalorder %s21, 9
      %p310 = pnand %p308, %p309
      %p311 = pneg %p310
      // Predicated region
      $region37: #{tpu_custom_call.1} parent=5 // pred_check
        _
      $region38: #{tpu_custom_call.1} parent=5 // pred_check_branch
        %313 = sbr.rel (%p310) target = $region40
      $region39: #{tpu_custom_call.1} parent=5 // pred_region
        %s314 = ssub.s32 %s21, 1
        %s315 = sand.u32 %s48, 1
        %s316 = scalar_lea.sflag [#allocation3], %s315
        %s317 = sand.u32 %s48, 1
        %s318 = smul.addr %s317, 64
        %s319 = scalar_lea.vmem [#allocation2], %s318
        // Predicated region
        $region41: #{tpu_custom_call.1} parent=39 // pred_check
          %p320 = pneg %p61
        $region42: #{tpu_custom_call.1} parent=39 // pred_check_branch
          %322 = sbr.rel (%p320) target = $region44
        $region43: #{tpu_custom_call.1} parent=39 // pred_region
          %324 = dma.done %s316, 1024
        $region44: #{tpu_custom_call.1} parent=39 // pred_fallthru
          _
        %s325 = sand.u32 %s26, 1
        %s326 = scalar_lea.sflag [#allocation6], %s325
        %s327 = sand.u32 %s78, 1
        %s328 = smul.addr %s327, 8
        %s329 = scalar_lea.vmem [#allocation5], %s328
        // Predicated region
        $region45: #{tpu_custom_call.1} parent=39 // pred_check
          %p330 = pneg %p91
        $region46: #{tpu_custom_call.1} parent=39 // pred_check_branch
          %332 = sbr.rel (%p330) target = $region48
        $region47: #{tpu_custom_call.1} parent=39 // pred_region
          %334 = dma.done %s326, 128
        $region48: #{tpu_custom_call.1} parent=39 // pred_fallthru
          _
        %s335 = sand.u32 %s26, 1
        %s336 = scalar_lea.sflag [#allocation6], %s335
        %s337 = sand.u32 %s112, 1
        %s338 = smul.addr %s337, 8
        %s339 = scalar_lea.vmem [#allocation7], %s338
        // Predicated region
        $region49: #{tpu_custom_call.1} parent=39 // pred_check
          %p340 = pneg %p125
        $region50: #{tpu_custom_call.1} parent=39 // pred_check_branch
          %342 = sbr.rel (%p340) target = $region52
        $region51: #{tpu_custom_call.1} parent=39 // pred_region
          %344 = dma.done %s336, 128
        $region52: #{tpu_custom_call.1} parent=39 // pred_fallthru
          _
        // Predicated region
        $region53: #{tpu_custom_call.1} parent=39 // pred_check
          %p345 = pneg %p146
        $region54: #{tpu_custom_call.1} parent=39 // pred_check_branch
          %347 = sbr.rel (%p345) target = $region56
        $region55: #{tpu_custom_call.1} parent=39 // pred_region
          %349 = dma.done [#allocation9], 3072
        $region56: #{tpu_custom_call.1} parent=39 // pred_fallthru
          _
        %s350 = sand.u32 %s48, 1
        %s351 = scalar_lea.sflag [#allocation3], %s350
        %s352 = sand.u32 %s48, 1
        %s353 = smul.addr %s352, 64
        %s354 = scalar_lea.vmem [#allocation2], %s353
        %p355 = pneg %p61
        %p356 = pneg %p58
        %s357 = sand.u32 %s26, 1
        %s358 = scalar_lea.sflag [#allocation6], %s357
        %s359 = sand.u32 %s78, 1
        %s360 = smul.addr %s359, 8
        %s361 = scalar_lea.vmem [#allocation5], %s360
        %p362 = pneg %p91
        %p363 = pneg %p88
        %s364 = sand.u32 %s26, 1
        %s365 = scalar_lea.sflag [#allocation6], %s364
        %s366 = sand.u32 %s112, 1
        %s367 = smul.addr %s366, 8
        %s368 = scalar_lea.vmem [#allocation7], %s367
        %p369 = pneg %p125
        %p370 = pneg %p122
        %p371 = pneg %p146
        %p372 = pneg %p143
        %p373 = pneg %p167
        %p374 = pneg %p164
        %p375 = pneg %p195
        %p376 = pneg %p192
        %s377 = sand.u32 %s182, 1
        %s378 = scalar_lea.sflag [#allocation4], %s377
        %s379 = sand.u32 %s182, 1
        %s380 = smul.addr %s379, 64
        %s381 = scalar_lea.vmem [#allocation10], %s380
        %s382 = smul.u32 4, %s31
        %s383 = smul.u32 %s31, 4
        %s384 = sadd.s32 %s31, 1
        %s385 = smul.u32 %s384, 4
        %s386 = sadd.s32 %s385, 1
        %s387 = smul.u32 4, %s31
        %v389 = vld [vmem:[%s319] sm:$0xff]
        %v390 = vld [vmem:[%s319 + $0x8] sm:$0xff]
        %v391 = vld [vmem:[%s319 + $0x10] sm:$0xff]
        %v392 = vld [vmem:[%s319 + $0x18] sm:$0xff]
        %v393 = vld [vmem:[%s319 + $0x20] sm:$0xff]
        %v394 = vld [vmem:[%s319 + $0x28] sm:$0xff]
        %v395 = vld [vmem:[%s319 + $0x30] sm:$0xff]
        %v396 = vld [vmem:[%s319 + $0x38] sm:$0xff]
        %v397 = vld [vmem:[%s329] sm:$0xf]
        %v398 = vld [vmem:[%s329 + $0x4] sm:$0xf]
        %v399 = vpack.c.bf16 %v389, %v389
        %v400 = vpack.c.bf16 %v390, %v390
        %v401 = vpack.c.bf16 %v391, %v391
        %v402 = vpack.c.bf16 %v392, %v392
        %v403 = vpack.c.bf16 %v393, %v393
        %v404 = vpack.c.bf16 %v394, %v394
        %v405 = vpack.c.bf16 %v395, %v395
        %v406 = vpack.c.bf16 %v396, %v396
        %v407 = vld [vmem:[%s339] sm:$0xf]
        %v408 = vld [vmem:[%s339 + $0x4] sm:$0xf]
        %v421 = vunpack.c.l.b16 %v397
        %v422 = vunpack.c.l.b16 %v398
        %v423 = vunpack.c.l.b16 %v399
        %v424 = vunpack.c.l.b16 %v400
        %v425 = vunpack.c.l.b16 %v401
        %v426 = vunpack.c.l.b16 %v402
        %v427 = vunpack.c.l.b16 %v403
        %v428 = vunpack.c.l.b16 %v404
        %v429 = vunpack.c.l.b16 %v405
        %v430 = vunpack.c.l.b16 %v406
        %v431 = vunpack.c.l.b16 %v407
        %v432 = vunpack.c.l.b16 %v408
        %v433 = vpack.c.b16 %v422, %v421
        %v434 = vpack.c.b16 %v424, %v423
        %v435 = vpack.c.b16 %v426, %v425
        %v436 = vpack.c.b16 %v428, %v427
        %v437 = vpack.c.b16 %v430, %v429
        %v438 = vpack.c.b16 %v432, %v431
        %v440 = vshrl.u32 %v433, 16
        %v442 = vrot.slane %v440, 7
        %v443 = vshll.u32 %v433, 16
        %v445 = vor.u32 %v442, %v443
        %v447 = vshrl.u32 %v434, 16
        %v449 = vrot.slane %v447, 7
        %v450 = vshll.u32 %v434, 16
        %v452 = vor.u32 %v449, %v450
        %v454 = vshrl.u32 %v435, 16
        %v456 = vrot.slane %v454, 7
        %v457 = vshll.u32 %v435, 16
        %v459 = vor.u32 %v456, %v457
        %v461 = vshrl.u32 %v436, 16
        %v463 = vrot.slane %v461, 7
        %v464 = vshll.u32 %v436, 16
        %v466 = vor.u32 %v463, %v464
        %v468 = vshrl.u32 %v437, 16
        %v470 = vrot.slane %v468, 7
        %v471 = vshll.u32 %v437, 16
        %v473 = vor.u32 %v470, %v471
        %v475 = vshrl.u32 %v438, 16
        %v477 = vrot.slane %v475, 7
        %v478 = vshll.u32 %v438, 16
        %v480 = vor.u32 %v477, %v478
        %vm493 = vcmask 1040384
        %vm494 = vsmask.f32 256
        %vm495 = vmand %vm493, %vm494
        %v496 = vsel %vm495, 0, %v445
        %v497 = vsel %vm495, 0, %v452
        %v498 = vsel %vm495, 0, %v459
        %v499 = vsel %vm495, 0, %v466
        %v500 = vsel %vm495, 0, %v473
        %v501 = vsel %vm495, 0, %v480
        %v502 = vsel %vm495, %v442, 0
        %v503 = vsel %vm495, %v449, 0
        %v504 = vsel %vm495, %v456, 0
        %v505 = vsel %vm495, %v463, 0
        %v506 = vsel %vm495, %v470, 0
        %v507 = vsel %vm495, %v477, 0
        %vm508 = vsmask.f32 7424
        %v510 = vshrl.u32 %v496, 16
        %v512 = vshll.u32 %v496, 16
        %v514 = vrot.slane %v512, 1
        %v515 = vor.u32 %v510, %v514
        %v517 = vshll.u32 %v502, 16
        %v519 = vrot.slane %v517, 1
        %v520 = vsel %vm508, %v515, %v519
        %v522 = vshrl.u32 %v497, 16
        %v524 = vshll.u32 %v497, 16
        %v526 = vrot.slane %v524, 1
        %v527 = vor.u32 %v522, %v526
        %v529 = vshll.u32 %v503, 16
        %v531 = vrot.slane %v529, 1
        %v532 = vsel %vm508, %v527, %v531
        %v534 = vshrl.u32 %v498, 16
        %v536 = vshll.u32 %v498, 16
        %v538 = vrot.slane %v536, 1
        %v539 = vor.u32 %v534, %v538
        %v541 = vshll.u32 %v504, 16
        %v543 = vrot.slane %v541, 1
        %v544 = vsel %vm508, %v539, %v543
        %v546 = vshrl.u32 %v499, 16
        %v548 = vshll.u32 %v499, 16
        %v550 = vrot.slane %v548, 1
        %v551 = vor.u32 %v546, %v550
        %v553 = vshll.u32 %v505, 16
        %v555 = vrot.slane %v553, 1
        %v556 = vsel %vm508, %v551, %v555
        %v558 = vshrl.u32 %v500, 16
        %v560 = vshll.u32 %v500, 16
        %v562 = vrot.slane %v560, 1
        %v563 = vor.u32 %v558, %v562
        %v565 = vshll.u32 %v506, 16
        %v567 = vrot.slane %v565, 1
        %v568 = vsel %vm508, %v563, %v567
        %v570 = vshrl.u32 %v501, 16
        %v572 = vshll.u32 %v501, 16
        %v574 = vrot.slane %v572, 1
        %v575 = vor.u32 %v570, %v574
        %v577 = vshll.u32 %v507, 16
        %v579 = vrot.slane %v577, 1
        %v580 = vsel %vm508, %v575, %v579
        %581 = vrot.lane.b32.xlu0 %v520, 64
        %v582 = vpop.permute.xlu0 %581
        %583 = vrot.lane.b32.xlu0 %v532, 64
        %v584 = vpop.permute.xlu0 %583
        %585 = vrot.lane.b32.xlu0 %v544, 64
        %v586 = vpop.permute.xlu0 %585
        %587 = vrot.lane.b32.xlu0 %v556, 64
        %v588 = vpop.permute.xlu0 %587
        %589 = vrot.lane.b32.xlu0 %v568, 64
        %v590 = vpop.permute.xlu0 %589
        %591 = vrot.lane.b32.xlu0 %v580, 64
        %v592 = vpop.permute.xlu0 %591
        %vm605 = vcmask 1046528
        %v606 = vrot.slane %v496, 1
        %v607 = vrot.slane %v502, 1
        %v608 = vsel %vm605, %v606, %v607
        %v609 = vrot.slane %v497, 1
        %v610 = vrot.slane %v503, 1
        %v611 = vsel %vm605, %v609, %v610
        %v612 = vrot.slane %v498, 1
        %v613 = vrot.slane %v504, 1
        %v614 = vsel %vm605, %v612, %v613
        %v615 = vrot.slane %v499, 1
        %v616 = vrot.slane %v505, 1
        %v617 = vsel %vm605, %v615, %v616
        %v618 = vrot.slane %v500, 1
        %v619 = vrot.slane %v506, 1
        %v620 = vsel %vm605, %v618, %v619
        %v621 = vrot.slane %v501, 1
        %v622 = vrot.slane %v507, 1
        %v623 = vsel %vm605, %v621, %v622
        %vm624 = vcmask 523264
        %v626 = vsel %vm624, %v496, %v582
        %v629 = vsel %vm624, %v497, %v584
        %v632 = vsel %vm624, %v498, %v586
        %v635 = vsel %vm624, %v499, %v588
        %v638 = vsel %vm624, %v500, %v590
        %v641 = vsel %vm624, %v501, %v592
        %v643 = vld [vmem:[#allocation8] sm:$0xff]
        %v644 = vld [vmem:[#allocation8 + $0x8] sm:$0xff]
        %v645 = vld [vmem:[#allocation8 + $0x10] sm:$0xff]
        %v646 = vld [vmem:[#allocation8 + $0x18] sm:$0xff]
        %v647 = vld [vmem:[#allocation8 + $0x20] sm:$0xff]
        %v648 = vld [vmem:[#allocation8 + $0x28] sm:$0xff]
        %v649 = vld [vmem:[#allocation8 + $0x30] sm:$0xff]
        %v650 = vld [vmem:[#allocation8 + $0x38] sm:$0xff]
        %v651 = vld [vmem:[#allocation8 + $0x40] sm:$0xff]
        %v652 = vld [vmem:[#allocation8 + $0x48] sm:$0xff]
        %v653 = vld [vmem:[#allocation8 + $0x50] sm:$0xff]
        %v654 = vld [vmem:[#allocation8 + $0x58] sm:$0xff]
        %v655 = vld [vmem:[#allocation8 + $0x60] sm:$0xff]
        %v656 = vld [vmem:[#allocation8 + $0x68] sm:$0xff]
        %v657 = vld [vmem:[#allocation8 + $0x70] sm:$0xff]
        %v658 = vld [vmem:[#allocation8 + $0x78] sm:$0xff]
        %v659 = vld [vmem:[#allocation8 + $0x80] sm:$0xff]
        %v660 = vld [vmem:[#allocation8 + $0x88] sm:$0xff]
        %v661 = vld [vmem:[#allocation8 + $0x90] sm:$0xff]
        %v662 = vld [vmem:[#allocation8 + $0x98] sm:$0xff]
        %v663 = vld [vmem:[#allocation8 + $0xa0] sm:$0xff]
        %v664 = vld [vmem:[#allocation8 + $0xa8] sm:$0xff]
        %v665 = vld [vmem:[#allocation8 + $0xb0] sm:$0xff]
        %v666 = vld [vmem:[#allocation8 + $0xb8] sm:$0xff]
        %v691 = vunpack.c.l.b16 %v643
        %v692 = vunpack.c.h.b16 %v643
        %v693 = vunpack.c.l.b16 %v644
        %v694 = vunpack.c.h.b16 %v644
        %v695 = vunpack.c.l.b16 %v645
        %v696 = vunpack.c.h.b16 %v645
        %v697 = vunpack.c.l.b16 %v646
        %v698 = vunpack.c.h.b16 %v646
        %v699 = vunpack.c.l.b16 %v647
        %v700 = vunpack.c.h.b16 %v647
        %v701 = vunpack.c.l.b16 %v648
        %v702 = vunpack.c.h.b16 %v648
        %v703 = vunpack.c.l.b16 %v649
        %v704 = vunpack.c.h.b16 %v649
        %v705 = vunpack.c.l.b16 %v650
        %v706 = vunpack.c.h.b16 %v650
        %v707 = vunpack.c.l.b16 %v651
        %v708 = vunpack.c.h.b16 %v651
        %v709 = vunpack.c.l.b16 %v652
        %v710 = vunpack.c.h.b16 %v652
        %v711 = vunpack.c.l.b16 %v653
        %v712 = vunpack.c.h.b16 %v653
        %v713 = vunpack.c.l.b16 %v654
        %v714 = vunpack.c.h.b16 %v654
        %v715 = vunpack.c.l.b16 %v655
        %v716 = vunpack.c.h.b16 %v655
        %v717 = vunpack.c.l.b16 %v656
        %v718 = vunpack.c.h.b16 %v656
        %v719 = vunpack.c.l.b16 %v657
        %v720 = vunpack.c.h.b16 %v657
        %v721 = vunpack.c.l.b16 %v658
        %v722 = vunpack.c.h.b16 %v658
        %v723 = vunpack.c.l.b16 %v659
        %v724 = vunpack.c.h.b16 %v659
        %v725 = vunpack.c.l.b16 %v660
        %v726 = vunpack.c.h.b16 %v660
        %v727 = vunpack.c.l.b16 %v661
        %v728 = vunpack.c.h.b16 %v661
        %v729 = vunpack.c.l.b16 %v662
        %v730 = vunpack.c.h.b16 %v662
        %v731 = vunpack.c.l.b16 %v663
        %v732 = vunpack.c.h.b16 %v663
        %v733 = vunpack.c.l.b16 %v664
        %v734 = vunpack.c.h.b16 %v664
        %v735 = vunpack.c.l.b16 %v665
        %v736 = vunpack.c.h.b16 %v665
        %v737 = vunpack.c.l.b16 %v666
        %v738 = vunpack.c.h.b16 %v666
        %v739 = vpack.c.b16 %v693, %v691
        %v740 = vpack.c.b16 %v694, %v692
        %v741 = vpack.c.b16 %v697, %v695
        %v742 = vpack.c.b16 %v698, %v696
        %v743 = vpack.c.b16 %v701, %v699
        %v744 = vpack.c.b16 %v702, %v700
        %v745 = vpack.c.b16 %v705, %v703
        %v746 = vpack.c.b16 %v706, %v704
        %v747 = vpack.c.b16 %v709, %v707
        %v748 = vpack.c.b16 %v710, %v708
        %v749 = vpack.c.b16 %v713, %v711
        %v750 = vpack.c.b16 %v714, %v712
        %v751 = vpack.c.b16 %v717, %v715
        %v752 = vpack.c.b16 %v718, %v716
        %v753 = vpack.c.b16 %v721, %v719
        %v754 = vpack.c.b16 %v722, %v720
        %v755 = vpack.c.b16 %v725, %v723
        %v756 = vpack.c.b16 %v726, %v724
        %v757 = vpack.c.b16 %v729, %v727
        %v758 = vpack.c.b16 %v730, %v728
        %v759 = vpack.c.b16 %v733, %v731
        %v760 = vpack.c.b16 %v734, %v732
        %v761 = vpack.c.b16 %v737, %v735
        %v762 = vpack.c.b16 %v738, %v736
        %v788 = vsel %vm624, %v608, 0
        %v791 = vsel %vm624, %v611, 0
        %v794 = vsel %vm624, %v614, 0
        %v797 = vsel %vm624, %v617, 0
        %v800 = vsel %vm624, %v620, 0
        %v803 = vsel %vm624, %v623, 0
        %805 = vmatpush.bf16.msra.mxu0 %v753
        %806 = vmatpush.bf16.msra.mxu0 %v751
        %807 = vmatpush.bf16.msra.mxu0 %v749
        %808 = vmatpush.bf16.msra.mxu0 %v747
        %809 = vmatpush.bf16.msra.mxu0 %v745
        %810 = vmatpush.bf16.msra.mxu0 %v743
        %811 = vmatpush.bf16.msra.mxu0 %v741
        %812 = vmatpush.bf16.msra.mxu0 %v739
        %813 = vmatmul.bf16.gmra.mxu0 %v626
        %v814 = vpop.f32.mrf.mxu0
        %v815 = vadd.f32 0.0, %v814
        %v816 = vpop.f32.mrf.mxu0
        %v817 = vadd.f32 0.0, %v816
        %818 = vmatmul.bf16.gmra.mxu0 %v629
        %v819 = vpop.f32.mrf.mxu0
        %v820 = vadd.f32 0.0, %v819
        %v821 = vpop.f32.mrf.mxu0
        %v822 = vadd.f32 0.0, %v821
        %823 = vmatmul.bf16.gmra.mxu0 %v632
        %v824 = vpop.f32.mrf.mxu0
        %v825 = vadd.f32 0.0, %v824
        %v826 = vpop.f32.mrf.mxu0
        %v827 = vadd.f32 0.0, %v826
        %828 = vmatmul.bf16.gmra.mxu0 %v635
        %v829 = vpop.f32.mrf.mxu0
        %v830 = vadd.f32 0.0, %v829
        %v831 = vpop.f32.mrf.mxu0
        %v832 = vadd.f32 0.0, %v831
        %833 = vmatmul.bf16.gmra.mxu0 %v638
        %v834 = vpop.f32.mrf.mxu0
        %v835 = vadd.f32 0.0, %v834
        %v836 = vpop.f32.mrf.mxu0
        %v837 = vadd.f32 0.0, %v836
        %838 = vmatmul.bf16.gmra.mxu0 %v641
        %v839 = vpop.f32.mrf.mxu0
        %v840 = vpop.f32.mrf.mxu0
        %841 = vdwg.mxu0
        %842 = vmatpush.bf16.msra.mxu0 0
        %843 = vmatpush.bf16.msra.mxu0 0
        %844 = vmatpush.bf16.msra.mxu0 0
        %845 = vmatpush.bf16.msra.mxu0 0
        %846 = vmatpush.bf16.msra.mxu0 %v761
        %847 = vmatpush.bf16.msra.mxu0 %v759
        %848 = vmatpush.bf16.msra.mxu0 %v757
        %849 = vmatpush.bf16.msra.mxu0 %v755
        %850 = vmatmul.bf16.gmra.mxu0 %v788
        %v851 = vpop.f32.mrf.mxu0
        %v852 = vadd.f32 %v815, %v851
        %v853 = vpop.f32.mrf.mxu0
        %v854 = vadd.f32 %v817, %v853
        %855 = vmatmul.bf16.gmra.mxu0 %v791
        %v856 = vpop.f32.mrf.mxu0
        %v857 = vadd.f32 %v820, %v856
        %v858 = vpop.f32.mrf.mxu0
        %v859 = vadd.f32 %v822, %v858
        %860 = vmatmul.bf16.gmra.mxu0 %v794
        %v861 = vpop.f32.mrf.mxu0
        %v862 = vadd.f32 %v825, %v861
        %v863 = vpop.f32.mrf.mxu0
        %v864 = vadd.f32 %v827, %v863
        %865 = vmatmul.bf16.gmra.mxu0 %v797
        %v866 = vpop.f32.mrf.mxu0
        %v867 = vadd.f32 %v830, %v866
        %v868 = vpop.f32.mrf.mxu0
        %v869 = vadd.f32 %v832, %v868
        %870 = vmatmul.bf16.gmra.mxu0 %v800
        %v871 = vpop.f32.mrf.mxu0
        %v872 = vadd.f32 %v835, %v871
        %v873 = vpop.f32.mrf.mxu0
        %v874 = vadd.f32 %v837, %v873
        %875 = vmatmul.bf16.gmra.mxu0 %v803
        %v876 = vpop.f32.mrf.mxu0
        %v877 = vpop.f32.mrf.mxu0
        %878 = vdwg.mxu0
        %879 = vmatpush.bf16.msra.mxu0 %v754
        %880 = vmatpush.bf16.msra.mxu0 %v752
        %881 = vmatpush.bf16.msra.mxu0 %v750
        %882 = vmatpush.bf16.msra.mxu0 %v748
        %883 = vmatpush.bf16.msra.mxu0 %v746
        %884 = vmatpush.bf16.msra.mxu0 %v744
        %885 = vmatpush.bf16.msra.mxu0 %v742
        %886 = vmatpush.bf16.msra.mxu0 %v740
        %887 = vmatmul.bf16.gmra.mxu0 %v626
        %v888 = vpop.f32.mrf.mxu0
        %v889 = vpop.f32.mrf.mxu0
        %890 = vmatmul.bf16.gmra.mxu0 %v629
        %v891 = vpop.f32.mrf.mxu0
        %v892 = vpop.f32.mrf.mxu0
        %893 = vmatmul.bf16.gmra.mxu0 %v632
        %v894 = vpop.f32.mrf.mxu0
        %v895 = vadd.f32 0.0, %v894
        %v896 = vpop.f32.mrf.mxu0
        %v897 = vadd.f32 0.0, %v896
        %898 = vmatmul.bf16.gmra.mxu0 %v635
        %v899 = vpop.f32.mrf.mxu0
        %v900 = vadd.f32 0.0, %v899
        %v901 = vpop.f32.mrf.mxu0
        %v902 = vadd.f32 0.0, %v901
        %903 = vmatmul.bf16.gmra.mxu0 %v638
        %v904 = vpop.f32.mrf.mxu0
        %v905 = vadd.f32 0.0, %v904
        %v906 = vpop.f32.mrf.mxu0
        %v907 = vadd.f32 0.0, %v906
        %908 = vmatmul.bf16.gmra.mxu0 %v641
        %v909 = vpop.f32.mrf.mxu0
        %v910 = vadd.f32 0.0, %v909
        %v911 = vpop.f32.mrf.mxu0
        %v912 = vadd.f32 0.0, %v911
        %913 = vdwg.mxu0
        %914 = vmatpush.bf16.msra.mxu0 0
        %915 = vmatpush.bf16.msra.mxu0 0
        %916 = vmatpush.bf16.msra.mxu0 0
        %917 = vmatpush.bf16.msra.mxu0 0
        %918 = vmatpush.bf16.msra.mxu0 %v762
        %919 = vmatpush.bf16.msra.mxu0 %v760
        %920 = vmatpush.bf16.msra.mxu0 %v758
        %921 = vmatpush.bf16.msra.mxu0 %v756
        %922 = vmatmul.bf16.gmra.mxu0 %v788
        %v923 = vpop.f32.mrf.mxu0
        %v924 = vpop.f32.mrf.mxu0
        %925 = vmatmul.bf16.gmra.mxu0 %v791
        %v926 = vpop.f32.mrf.mxu0
        %v927 = vpop.f32.mrf.mxu0
        %928 = vmatmul.bf16.gmra.mxu0 %v794
        %v929 = vpop.f32.mrf.mxu0
        %v930 = vadd.f32 %v895, %v929
        %v931 = vpop.f32.mrf.mxu0
        %v932 = vadd.f32 %v897, %v931
        %933 = vmatmul.bf16.gmra.mxu0 %v797
        %v934 = vpop.f32.mrf.mxu0
        %v935 = vadd.f32 %v900, %v934
        %v936 = vpop.f32.mrf.mxu0
        %v937 = vadd.f32 %v902, %v936
        %938 = vmatmul.bf16.gmra.mxu0 %v800
        %v939 = vpop.f32.mrf.mxu0
        %v940 = vadd.f32 %v905, %v939
        %v941 = vpop.f32.mrf.mxu0
        %v942 = vadd.f32 %v907, %v941
        %943 = vmatmul.bf16.gmra.mxu0 %v803
        %v944 = vpop.f32.mrf.mxu0
        %v945 = vadd.f32 %v910, %v944
        %v946 = vpop.f32.mrf.mxu0
        %v947 = vadd.f32 %v912, %v946
        %948 = vdwg.mxu0
        %957 = vrot.lane.b32.xlu0 %v857, 64
        %v958 = vpop.permute.xlu0 %957
        %959 = vrot.lane.b32.xlu0 %v859, 64
        %v960 = vpop.permute.xlu0 %959
        %961 = vrot.lane.b32.xlu0 %v862, 64
        %v962 = vpop.permute.xlu0 %961
        %963 = vrot.lane.b32.xlu0 %v864, 64
        %v964 = vpop.permute.xlu0 %963
        %965 = vrot.lane.b32.xlu0 %v867, 64
        %v966 = vpop.permute.xlu0 %965
        %967 = vrot.lane.b32.xlu0 %v869, 64
        %v968 = vpop.permute.xlu0 %967
        %969 = vrot.lane.b32.xlu0 %v872, 64
        %v970 = vpop.permute.xlu0 %969
        %971 = vrot.lane.b32.xlu0 %v874, 64
        %v972 = vpop.permute.xlu0 %971
        %v981 = vadd.f32 %v852, %v958
        %v982 = vadd.f32 %v854, %v960
        %v983 = vadd.f32 %v857, %v962
        %v984 = vadd.f32 %v859, %v964
        %v985 = vadd.f32 %v862, %v966
        %v986 = vadd.f32 %v864, %v968
        %v987 = vadd.f32 %v867, %v970
        %v988 = vadd.f32 %v869, %v972
        %v989 = vadd.f32 %v981, %v930
        %v990 = vadd.f32 %v982, %v932
        %v991 = vadd.f32 %v983, %v935
        %v992 = vadd.f32 %v984, %v937
        %v993 = vadd.f32 %v985, %v940
        %v994 = vadd.f32 %v986, %v942
        %v995 = vadd.f32 %v987, %v945
        %v996 = vadd.f32 %v988, %v947
        %v997 = vld [vmem:[%s4] sm:$0x1]
        %v999 = vperm.slane %v997, 0
        %v1001 = vadd.f32 %v989, %v999
        %v1002 = vadd.f32 %v990, %v999
        %v1003 = vadd.f32 %v991, %v999
        %v1004 = vadd.f32 %v992, %v999
        %v1005 = vadd.f32 %v993, %v999
        %v1006 = vadd.f32 %v994, %v999
        %v1007 = vadd.f32 %v995, %v999
        %v1008 = vadd.f32 %v996, %v999
        %v1009 = vmax.f32 %v1001, 0.0
        %v1010 = vmax.f32 %v1002, 0.0
        %v1011 = vmax.f32 %v1003, 0.0
        %v1012 = vmax.f32 %v1004, 0.0
        %v1013 = vmax.f32 %v1005, 0.0
        %v1014 = vmax.f32 %v1006, 0.0
        %v1015 = vmax.f32 %v1007, 0.0
        %v1016 = vmax.f32 %v1008, 0.0
        %1025 = vrot.lane.b32.xlu0 %v1009, 64
        %v1026 = vpop.permute.xlu0 %1025
        %1027 = vrot.lane.b32.xlu0 %v1010, 64
        %v1028 = vpop.permute.xlu0 %1027
        %1029 = vrot.lane.b32.xlu0 %v1011, 64
        %v1030 = vpop.permute.xlu0 %1029
        %1031 = vrot.lane.b32.xlu0 %v1012, 64
        %v1032 = vpop.permute.xlu0 %1031
        %1033 = vrot.lane.b32.xlu0 %v1013, 64
        %v1034 = vpop.permute.xlu0 %1033
        %1035 = vrot.lane.b32.xlu0 %v1014, 64
        %v1036 = vpop.permute.xlu0 %1035
        %1037 = vrot.lane.b32.xlu0 %v1015, 64
        %v1038 = vpop.permute.xlu0 %1037
        %1039 = vrot.lane.b32.xlu0 %v1016, 64
        %v1040 = vpop.permute.xlu0 %1039
        %v1049 = vsel %vm624, %v389, %v1026
        %v1050 = vsel %vm624, %v390, %v1028
        %v1051 = vsel %vm624, %v391, %v1030
        %v1052 = vsel %vm624, %v392, %v1032
        %v1053 = vsel %vm624, %v393, %v1034
        %v1054 = vsel %vm624, %v394, %v1036
        %v1055 = vsel %vm624, %v395, %v1038
        %v1056 = vsel %vm624, %v396, %v1040
        %1057 = vst [vmem:[%s381] sm:$0xff] %v1049
        %1058 = vst [vmem:[%s381 + $0x8] sm:$0xff] %v1050
        %1059 = vst [vmem:[%s381 + $0x10] sm:$0xff] %v1051
        %1060 = vst [vmem:[%s381 + $0x18] sm:$0xff] %v1052
        %1061 = vst [vmem:[%s381 + $0x20] sm:$0xff] %v1053
        %1062 = vst [vmem:[%s381 + $0x28] sm:$0xff] %v1054
        %1063 = vst [vmem:[%s381 + $0x30] sm:$0xff] %v1055
        %1064 = vst [vmem:[%s381 + $0x38] sm:$0xff] %v1056
        %s1065 = sand.u32 %s182, 1
        %s1066 = scalar_lea.sflag [#allocation4], %s1065
        %s1067 = sand.u32 %s182, 1
        %s1068 = smul.addr %s1067, 64
        %s1069 = scalar_lea.vmem [#allocation10], %s1068
        // Predicated region
        $region57: #{tpu_custom_call.1} parent=39 // pred_check
          %p1070 = pneg %p192
        $region58: #{tpu_custom_call.1} parent=39 // pred_check_branch
          %1072 = sbr.rel (%p1070) target = $region60
        $region59: #{tpu_custom_call.1} parent=39 // pred_region
          %s1073 = smul.u32 4, %s31
          %1075 = vsyncadd %s1066, 0
          %s1076 = smul.addr %s1073, 2
          %s1077 = smul.addr %s30, 32
          %s1078 = sadd.s32 %s1076, %s1077
          %s1079 = smul.addr %s1078, 8
          %s1080 = scalar_lea.hbm %s5, %s1079
          %s1081 = sshll.u32 %s1069, 4
          %s1082 = int_to_ptr.vmem [resolvable:$true] %s1081
          %s1083 = sshll.u32 %s1080, 4
          %s1084 = int_to_ptr.hbm [resolvable:$true] %s1083
          %1089 = dma.vmem_to_hbm [thread:$0]  %s1082, 1024, %s1084, %s1066, 128, 128, 8
        $region60: #{tpu_custom_call.1} parent=39 // pred_fallthru
          _
      $region40: #{tpu_custom_call.1} parent=5 // pred_fallthru
        _
      %p1090 = scmp.le.s32.totalorder 2, %s21
      // Predicated region
      $region61: #{tpu_custom_call.1} parent=5 // pred_check
        %p1091 = pneg %p1090
      $region62: #{tpu_custom_call.1} parent=5 // pred_check_branch
        %1093 = sbr.rel (%p1091) target = $region64
      $region63: #{tpu_custom_call.1} parent=5 // pred_region
        %s1094 = ssub.s32 %s21, 2
        // Predicated region
        $region65: #{tpu_custom_call.1} parent=63 // pred_check
          %p1095 = pneg %p198
        $region66: #{tpu_custom_call.1} parent=63 // pred_check_branch
          %1097 = sbr.rel (%p1095) target = $region68
        $region67: #{tpu_custom_call.1} parent=63 // pred_region
          %s1098 = sand.u32 %s183, 1
          %s1099 = scalar_lea.sflag [#allocation4], %s1098
          %s1100 = sand.u32 %s183, 1
          %s1101 = smul.addr %s1100, 64
          %s1102 = scalar_lea.vmem [#allocation10], %s1101
          %1104 = dma.done %s1099, 1024
        $region68: #{tpu_custom_call.1} parent=63 // pred_fallthru
          _
      $region64: #{tpu_custom_call.1} parent=5 // pred_fallthru
        _
    $region6: #{tpu_custom_call.1} parent=1 // loop_footer
      %s25 = sadd.s32 1, %s21
    $region7: #{tpu_custom_call.1} parent=1 // loop_footer_branch
      %20 = sbr.rel target = $region3
    $region8: #{tpu_custom_call.1} parent=1 // loop_exit
      _
    %1105 = vsyncpa [#allocation3], 1
    %s1106 = scalar_lea.sflag [#allocation3], 1
    %1107 = vsyncpa %s1106, 1
    %1108 = vsyncpa [#allocation6], 1
    %s1109 = scalar_lea.sflag [#allocation6], 1
    %1110 = vsyncpa %s1109, 1
    %1111 = vsyncpa [#allocation9], 1
    %1112 = vsyncpa [#allocation4], 1
    %s1113 = scalar_lea.sflag [#allocation4], 1
    %1114 = vsyncpa %s1113, 1

</llo_original>
